<compile_context>
chip_gen: v7x
topology: tpu7x:2x2x1
jax: 0.10.0
libtpu: 0.0.40
codegen_flags: <defaults>
</compile_context>

<pallas_src>
import functools

import jax
import jax.numpy as jnp
from jax.experimental import pallas as pl
from jax.experimental.pallas import tpu as pltpu


def _round_up(a: int, b: int) -> int:
    return ((a + b - 1) // b) * b


def _cdiv(a: int, b: int) -> int:
    return -(-a // b)


def _fm_kernel(x_ref, o_ref, *, num_fields, embed_dim, reduce_sum):
    """x_ref: (tb, F*D) lane-dense tile; o_ref: (tb, 1) or (tb, D)."""
    x = x_ref[...].astype(jnp.float32)               # full-lane loads, f32 math
    s = x[:, 0:embed_dim]                             # field 0
    ssq = s * s
    for f in range(1, num_fields):                    # F is small & static -> unrolled
        xf = x[:, f * embed_dim:(f + 1) * embed_dim]
        s = s + xf
        ssq = ssq + xf * xf
    ix = 0.5 * (s * s - ssq)                          # (tb, D), per-row only
    if reduce_sum:
        ix = jnp.sum(ix, axis=-1, keepdims=True)      # lane reduce -> (tb, 1)
    o_ref[...] = ix.astype(o_ref.dtype)


def _pick_batch_tile(B, FD, D, in_itemsize, out_itemsize, tb_cap, vmem_budget):
    """Largest 128-multiple tile fitting the VMEM budget; >=2 steps for v7x when possible."""
    fd_vmem = _round_up(FD, 128)                      # Mosaic pads lanes internally
    d_vmem = _round_up(D, 128)
    # per-row VMEM: 2x double-buffered input + f32 working copy + s/ssq/ix temps + 2x output
    bytes_per_row = (fd_vmem * (2 * in_itemsize + 4)
                     + 4 * 4 * d_vmem
                     + 2 * d_vmem * out_itemsize)
    tb_vmem = max(128, (vmem_budget // bytes_per_row) // 128 * 128)
    tb_max = max(128, min((tb_cap // 128) * 128 or 128, tb_vmem))
    if B > tb_max:
        return tb_max                                  # already >= 2 grid steps
    if B >= 512:
        return _round_up(_cdiv(B, 2), 128)             # split so both v7x TCs get a tile
    return B                                           # single block == full array dims


@functools.partial(jax.jit, static_argnames=("reduce_sum", "tb"))
def factorization_machine(x, *, reduce_sum=True, tb=1024):
    """x: (B, F, D). Returns (B, 1) if reduce_sum else (B, D)."""
    B, F, D = x.shape
    FD = F * D
    out_dtype = x.dtype
    in_itemsize = jnp.dtype(x.dtype).itemsize
    out_itemsize = jnp.dtype(out_dtype).itemsize

    x2 = x.reshape(B, FD)                              # metadata-only reshape, no HBM copy

    VMEM_LIMIT = 32 * 1024 * 1024                      # safe scoped limit on v5e/v6e/v7x
    tile_budget = VMEM_LIMIT - 12 * 1024 * 1024        # headroom for compiler scratch
    tb_eff = _pick_batch_tile(B, FD, D, in_itemsize, out_itemsize, tb, tile_budget)
    grid = (_cdiv(B, tb_eff),)                         # ragged trailing block OK: per-row
                                                       # math, OOB output rows are masked
    out_cols = 1 if reduce_sum else D
    kernel = functools.partial(_fm_kernel, num_fields=F, embed_dim=D,
                               reduce_sum=reduce_sum)

    flops = (3 * F + 4) * B * D
    bytes_accessed = B * FD * in_itemsize + B * out_cols * out_itemsize

    return pl.pallas_call(
        kernel,
        out_shape=jax.ShapeDtypeStruct((B, out_cols), out_dtype),
        grid=grid,
        in_specs=[pl.BlockSpec((tb_eff, FD), lambda i: (i, 0))],
        out_specs=pl.BlockSpec((tb_eff, out_cols), lambda i: (i, 0)),
        compiler_params=pltpu.CompilerParams(
            dimension_semantics=("parallel",),
            vmem_limit_bytes=VMEM_LIMIT,
        ),
        cost_estimate=pl.CostEstimate(
            flops=flops, transcendentals=0, bytes_accessed=bytes_accessed),
    )(x2)


def _reference(x, reduce_sum=True):
    square_of_sum = jnp.sum(x, axis=1) ** 2
    sum_of_square = jnp.sum(x ** 2, axis=1)
    ix = square_of_sum - sum_of_square
    if reduce_sum:
        ix = jnp.sum(ix, axis=1, keepdims=True)
    return 0.5 * ix


if __name__ == "__main__":
    key = jax.random.PRNGKey(0)
    k1, k2, k3 = jax.random.split(key, 3)

    # (batch, num_fields, embed_dim) — FD = 128 lanes, 2 grid steps (v7x-friendly)
    B, F, D = 512, 4, 32
    x = jax.random.normal(k1, (B, F, D), dtype=jnp.float32)

    out = jax.block_until_ready(factorization_machine(x, reduce_sum=True))
    ref = _reference(x, reduce_sum=True)
    assert out.shape == (B, 1), out.shape
    assert jnp.allclose(out, ref, atol=1e-3, rtol=1e-4), "reduce_sum=True mismatch"

    out2 = jax.block_until_ready(factorization_machine(x, reduce_sum=False))
    ref2 = _reference(x, reduce_sum=False)
    assert out2.shape == (B, D), out2.shape
    assert jnp.allclose(out2, ref2, atol=1e-3, rtol=1e-4), "reduce_sum=False mismatch"

    # batch not divisible by the tile (tb=128 forced) -> exercises the ragged
    # trailing block path with NO wrapper-side padding copy
    B3 = 300
    x3 = jax.random.normal(k2, (B3, F, D), dtype=jnp.float32)
    out3 = jax.block_until_ready(factorization_machine(x3, reduce_sum=True, tb=128))
    ref3 = _reference(x3, reduce_sum=True)
    assert out3.shape == (B3, 1), out3.shape
    assert jnp.allclose(out3, ref3, atol=1e-3, rtol=1e-4), "ragged-batch mismatch"

    # F*D not a multiple of 128 -> exercises block_dim == full array dim (no lane pad)
    B4, F4, D4 = 260, 5, 24
    x4 = jax.random.normal(k3, (B4, F4, D4), dtype=jnp.float32)
    out4 = jax.block_until_ready(factorization_machine(x4, reduce_sum=False))
    ref4 = _reference(x4, reduce_sum=False)
    assert out4.shape == (B4, D4), out4.shape
    assert jnp.allclose(out4, ref4, atol=1e-3, rtol=1e-4), "odd-FD mismatch"

    out5 = jax.block_until_ready(factorization_machine(x4, reduce_sum=True))
    ref5 = _reference(x4, reduce_sum=True)
    assert jnp.allclose(out5, ref5, atol=1e-3, rtol=1e-4), "odd-FD reduce mismatch"

    print("KERNEL_OK")
</pallas_src>

<mosaic_0001>
module attributes {stable_mosaic.version = 11 : i64} {
  func.func @_fm_kernel(%arg0: i32, %arg1: memref<256x128xf32, #tpu.memory_space<vmem>>, %arg2: memref<256x1xf32, #tpu.memory_space<vmem>>) attributes {dimension_semantics = [#tpu.dimension_semantics<parallel>], iteration_bounds = array<i64: 2>, scalar_prefetch = 0 : i64, scratch_operands = 0 : i64, tpu.core_type = #tpu.core_type<tc>, window_params = [{transform_indices = @transform_0, window_bounds = array<i64: 256, 128>}, {transform_indices = @transform_1, window_bounds = array<i64: 256, 1>}]} {
    %c0 = arith.constant 0 : index
    %c0_0 = arith.constant 0 : index
    %0 = vector.load %arg1[%c0, %c0_0] : memref<256x128xf32, #tpu.memory_space<vmem>>, vector<256x128xf32>
    %1 = vector.extract_strided_slice %0 {offsets = [0, 0], sizes = [256, 32], strides = [1, 1]} : vector<256x128xf32> to vector<256x32xf32>
    %2 = arith.mulf %1, %1 : vector<256x32xf32>
    %3 = vector.extract_strided_slice %0 {offsets = [0, 32], sizes = [256, 32], strides = [1, 1]} : vector<256x128xf32> to vector<256x32xf32>
    %4 = arith.addf %1, %3 : vector<256x32xf32>
    %5 = arith.mulf %3, %3 : vector<256x32xf32>
    %6 = arith.addf %2, %5 : vector<256x32xf32>
    %7 = vector.extract_strided_slice %0 {offsets = [0, 64], sizes = [256, 32], strides = [1, 1]} : vector<256x128xf32> to vector<256x32xf32>
    %8 = arith.addf %4, %7 : vector<256x32xf32>
    %9 = arith.mulf %7, %7 : vector<256x32xf32>
    %10 = arith.addf %6, %9 : vector<256x32xf32>
    %11 = vector.extract_strided_slice %0 {offsets = [0, 96], sizes = [256, 32], strides = [1, 1]} : vector<256x128xf32> to vector<256x32xf32>
    %12 = arith.addf %8, %11 : vector<256x32xf32>
    %13 = arith.mulf %11, %11 : vector<256x32xf32>
    %14 = arith.addf %10, %13 : vector<256x32xf32>
    %15 = arith.mulf %12, %12 : vector<256x32xf32>
    %16 = arith.subf %15, %14 : vector<256x32xf32>
    %cst = arith.constant 5.000000e-01 : f32
    %17 = vector.broadcast %cst : f32 to vector<256x32xf32>
    %18 = arith.mulf %17, %16 : vector<256x32xf32>
    %cst_1 = arith.constant dense<0.000000e+00> : vector<256xf32>
    %19 = vector.multi_reduction <add>, %18, %cst_1 [1] : vector<256x32xf32> to vector<256xf32>
    %20 = vector.shape_cast %19 : vector<256xf32> to vector<256x1xf32>
    %c0_2 = arith.constant 0 : index
    %c0_3 = arith.constant 0 : index
    %21 = vector.load %arg2[%c0_2, %c0_3] : memref<256x1xf32, #tpu.memory_space<vmem>>, vector<256x1xf32>
    tpu.vector_store %arg2[%c0_2, %c0_3], %20 {strides = array<i32>} : memref<256x1xf32, #tpu.memory_space<vmem>>, vector<256x1xf32>,
    return
  }
  func.func @transform_0(%arg0: i32) -> (i32, i32) {
    %c0_i32 = arith.constant 0 : i32
    %c0_i32_0 = arith.constant 0 : i32
    return %arg0, %c0_i32 : i32, i32
  }
  func.func @transform_1(%arg0: i32) -> (i32, i32) {
    %c0_i32 = arith.constant 0 : i32
    %c0_i32_0 = arith.constant 0 : i32
    return %arg0, %c0_i32 : i32, i32
  }
}

</mosaic_0001>

<llo_original>
// kernel: factorization_machine.1
$region0: #{factorization_machine.1}
  #allocation0 [shape = 'u32[]', space=smem, size = 0x4, offset = 0x4, fixed_abs, tag = 'smem constant byte address 0x4 - core index']
  #allocation1 [shape = 'u32[144,128]{1,0:T(1,128)}', space=vmem, size = 0x12000, scoped, tag = 'internal scratch']
  %s0 = inlined_call_operand.vmem [shape: f32[512,128], index: 0, kind: input, shape index: {}]
  %s1 = inlined_call_operand.vmem [shape: f32[512,1], index: 1, kind: output, shape index: {}]
  %s2 = sld [smem:[#allocation0]]
  $region37: #{factorization_machine.1} parent=0
    _
  %s4 = ssub.s32 1, %s2
  %s5 = scalar_select 0, %s4, %s2
  loop: start=0, step=1, limit=4
  $region2: #{factorization_machine.1} parent=0 // loop_pre_header
    _
  $region3: #{factorization_machine.1} parent=0 // loop_header
    %s7 = sphi 0, %s11
    %p8 = scmp.ge.s32.totalorder %s7, 4
    %s17 = sphi 0, %s19
    %s20 = sphi 0, %s17
    %s21 = sphi 0, %s20
    %s37 = sphi 0, %s21
    %s43 = sphi 0, %s45
    %s46 = sphi 0, %s43
    %s47 = sphi 0, %s46
    %s63 = sphi 0, %s47
  $region4: #{factorization_machine.1} parent=0 // loop_header_branch
    %10 = sbr.rel (%p8) target = $region8
  $region5: #{factorization_machine.1} parent=0 // loop_body
    %s12 = ssub.s32 %s7, 1
    %s13 = ssub.s32 %s7, 2
    %s14 = sadd.s32 %s7, 1
    %s15 = ssub.s32 %s7, %s14
    %p16 = scmp.eq.s32.totalorder %s15, 0
    %s18 = sadd.s32 %s17, 1
    %s19 = scalar_select %p16, %s17, %s18
    %p22 = pneg %p16
    %p23 = scmp.eq.s32.totalorder %s7, 1
    %p24 = por %p22, %p23
    %p25 = scmp.ne.s32.totalorder %s17, %s20
    %p26 = scmp.eq.s32.totalorder %s7, 0
    %p27 = por %p25, %p26
    %p28 = scmp.ne.s32.totalorder %s17, %s20
    %p29 = scmp.eq.s32.totalorder %s12, 1
    %p30 = por %p28, %p29
    %p31 = scmp.ne.s32.totalorder %s20, %s21
    %p32 = scmp.eq.s32.totalorder %s12, 0
    %p33 = por %p31, %p32
    %p34 = scmp.ne.s32.totalorder %s20, %s21
    %p35 = scmp.eq.s32.totalorder %s13, 1
    %p36 = por %p34, %p35
    %p38 = scmp.ne.s32.totalorder %s21, %s37
    %p39 = scmp.eq.s32.totalorder %s13, 0
    %p40 = por %p38, %p39
    %s41 = ssub.s32 %s7, %s14
    %p42 = scmp.eq.s32.totalorder %s41, 0
    %s44 = sadd.s32 %s43, 1
    %s45 = scalar_select %p42, %s43, %s44
    %p48 = pneg %p42
    %p49 = scmp.eq.s32.totalorder %s7, 1
    %p50 = por %p48, %p49
    %p51 = scmp.ne.s32.totalorder %s43, %s46
    %p52 = scmp.eq.s32.totalorder %s7, 0
    %p53 = por %p51, %p52
    %p54 = scmp.ne.s32.totalorder %s43, %s46
    %p55 = scmp.eq.s32.totalorder %s12, 1
    %p56 = por %p54, %p55
    %p57 = scmp.ne.s32.totalorder %s46, %s47
    %p58 = scmp.eq.s32.totalorder %s12, 0
    %p59 = por %p57, %p58
    %p60 = scmp.ne.s32.totalorder %s46, %s47
    %p61 = scmp.eq.s32.totalorder %s13, 1
    %p62 = por %p60, %p61
    %p64 = scmp.ne.s32.totalorder %s47, %s63
    %p65 = scmp.eq.s32.totalorder %s13, 0
    %p66 = por %p64, %p65
    %p67 = scmp.le.s32.totalorder 1, %s7
    %p68 = scmp.lt.s32.totalorder %s7, 3
    %p69 = pnand %p67, %p68
    %p70 = pneg %p69
    // Predicated region
    $region9: #{factorization_machine.1} parent=5 // pred_check
      _
    $region10: #{factorization_machine.1} parent=5 // pred_check_branch
      %72 = sbr.rel (%p69) target = $region12
    $region11: #{factorization_machine.1} parent=5 // pred_region
      %s73 = ssub.s32 %s7, 1
    $region12: #{factorization_machine.1} parent=5 // pred_fallthru
      _
    %p74 = scmp.lt.s32.totalorder %s7, 2
    // Predicated region
    $region13: #{factorization_machine.1} parent=5 // pred_check
      %p75 = pneg %p74
    $region14: #{factorization_machine.1} parent=5 // pred_check_branch
      %77 = sbr.rel (%p75) target = $region16
    $region15: #{factorization_machine.1} parent=5 // pred_region
      // Predicated region
      $region17: #{factorization_machine.1} parent=15 // pred_check
        %p78 = pneg %p27
      $region18: #{factorization_machine.1} parent=15 // pred_check_branch
        %80 = sbr.rel (%p78) target = $region20
      $region19: #{factorization_machine.1} parent=15 // pred_region
        %s81 = smul.u32 32, %s7
        %p82 = scmp.lt.s32.totalorder %s81, 63
        %s83 = scalar_select %p82, %s81, 63
        %s84 = smul.addr %s83, 8
        %s85 = scalar_lea.vmem %s0, %s84
        %s86 = smul.u32 32, %s7
      $region20: #{factorization_machine.1} parent=15 // pred_fallthru
        _
    $region16: #{factorization_machine.1} parent=5 // pred_fallthru
      _
    %p87 = scmp.le.s32.totalorder 1, %s7
    %p88 = scmp.lt.s32.totalorder %s7, 3
    %p89 = pnand %p87, %p88
    %p90 = pneg %p89
    // Predicated region
    $region21: #{factorization_machine.1} parent=5 // pred_check
      _
    $region22: #{factorization_machine.1} parent=5 // pred_check_branch
      %92 = sbr.rel (%p89) target = $region24
    $region23: #{factorization_machine.1} parent=5 // pred_region
      %s93 = ssub.s32 %s7, 1
      %s94 = smul.u32 32, %s12
      %p95 = scmp.lt.s32.totalorder %s94, 63
      %s96 = scalar_select %p95, %s94, 63
      %s97 = smul.addr %s96, 8
      %s98 = scalar_lea.vmem %s0, %s97
      %p99 = pneg %p33
      %p100 = pneg %p30
      %p101 = pneg %p59
      %p102 = pneg %p56
      %s103 = smul.u32 32, %s12
      %p104 = scmp.lt.s32.totalorder %s103, 63
      %s105 = scalar_select %p104, %s103, 63
      %s106 = smul.addr %s105, 8
      %s107 = scalar_lea.vmem %s1, %s106
      %s108 = smul.u32 32, %s12
      %p109 = scmp.lt.s32.totalorder %s108, 63
      %s110 = scalar_select %p109, %s108, 63
      %s111 = smul.addr %s110, 8
      %s112 = scalar_lea.vmem %s0, %s111
      %s113 = smul.u32 32, %s12
      %s114 = smul.u32 32, %s12
      %p115 = scmp.lt.s32.totalorder %s114, 63
      %s116 = scalar_select %p115, %s114, 63
      %s117 = smul.addr %s116, 8
      %s118 = scalar_lea.vmem %s1, %s117
      %s119 = smul.u32 32, %s12
      %v120 = vld [vmem:[%s112] sm:$0xff]
      %v121 = vld [vmem:[%s112 + $0x8] sm:$0xff]
      %v122 = vld [vmem:[%s112 + $0x10] sm:$0xff]
      %v123 = vld [vmem:[%s112 + $0x18] sm:$0xff]
      %v124 = vld [vmem:[%s112 + $0x20] sm:$0xff]
      %v125 = vld [vmem:[%s112 + $0x28] sm:$0xff]
      %v126 = vld [vmem:[%s112 + $0x30] sm:$0xff]
      %v127 = vld [vmem:[%s112 + $0x38] sm:$0xff]
      %v128 = vld [vmem:[%s112 + $0x40] sm:$0xff]
      %v129 = vld [vmem:[%s112 + $0x48] sm:$0xff]
      %v130 = vld [vmem:[%s112 + $0x50] sm:$0xff]
      %v131 = vld [vmem:[%s112 + $0x58] sm:$0xff]
      %v132 = vld [vmem:[%s112 + $0x60] sm:$0xff]
      %v133 = vld [vmem:[%s112 + $0x68] sm:$0xff]
      %v134 = vld [vmem:[%s112 + $0x70] sm:$0xff]
      %v135 = vld [vmem:[%s112 + $0x78] sm:$0xff]
      %v136 = vld [vmem:[%s112 + $0x80] sm:$0xff]
      %v137 = vld [vmem:[%s112 + $0x88] sm:$0xff]
      %v138 = vld [vmem:[%s112 + $0x90] sm:$0xff]
      %v139 = vld [vmem:[%s112 + $0x98] sm:$0xff]
      %v140 = vld [vmem:[%s112 + $0xa0] sm:$0xff]
      %v141 = vld [vmem:[%s112 + $0xa8] sm:$0xff]
      %v142 = vld [vmem:[%s112 + $0xb0] sm:$0xff]
      %v143 = vld [vmem:[%s112 + $0xb8] sm:$0xff]
      %v144 = vld [vmem:[%s112 + $0xc0] sm:$0xff]
      %v145 = vld [vmem:[%s112 + $0xc8] sm:$0xff]
      %v146 = vld [vmem:[%s112 + $0xd0] sm:$0xff]
      %v147 = vld [vmem:[%s112 + $0xd8] sm:$0xff]
      %v148 = vld [vmem:[%s112 + $0xe0] sm:$0xff]
      %v149 = vld [vmem:[%s112 + $0xe8] sm:$0xff]
      %v150 = vld [vmem:[%s112 + $0xf0] sm:$0xff]
      %v151 = vld [vmem:[%s112 + $0xf8] sm:$0xff]
      %v152 = vmul.f32 %v120, %v120
      %v153 = vmul.f32 %v121, %v121
      %v154 = vmul.f32 %v122, %v122
      %v155 = vmul.f32 %v123, %v123
      %v156 = vmul.f32 %v124, %v124
      %v157 = vmul.f32 %v125, %v125
      %v158 = vmul.f32 %v126, %v126
      %v159 = vmul.f32 %v127, %v127
      %v160 = vmul.f32 %v128, %v128
      %v161 = vmul.f32 %v129, %v129
      %v162 = vmul.f32 %v130, %v130
      %v163 = vmul.f32 %v131, %v131
      %v164 = vmul.f32 %v132, %v132
      %v165 = vmul.f32 %v133, %v133
      %v166 = vmul.f32 %v134, %v134
      %v167 = vmul.f32 %v135, %v135
      %v168 = vmul.f32 %v136, %v136
      %v169 = vmul.f32 %v137, %v137
      %v170 = vmul.f32 %v138, %v138
      %v171 = vmul.f32 %v139, %v139
      %v172 = vmul.f32 %v140, %v140
      %v173 = vmul.f32 %v141, %v141
      %v174 = vmul.f32 %v142, %v142
      %v175 = vmul.f32 %v143, %v143
      %v176 = vmul.f32 %v144, %v144
      %v177 = vmul.f32 %v145, %v145
      %v178 = vmul.f32 %v146, %v146
      %v179 = vmul.f32 %v147, %v147
      %v180 = vmul.f32 %v148, %v148
      %v181 = vmul.f32 %v149, %v149
      %v182 = vmul.f32 %v150, %v150
      %v183 = vmul.f32 %v151, %v151
      %216 = vrot.lane.b32.xlu0 %v120, 96
      %v217 = vpop.permute.xlu0 %216
      %218 = vrot.lane.b32.xlu0 %v121, 96
      %v219 = vpop.permute.xlu0 %218
      %220 = vrot.lane.b32.xlu0 %v122, 96
      %v221 = vpop.permute.xlu0 %220
      %222 = vrot.lane.b32.xlu0 %v123, 96
      %v223 = vpop.permute.xlu0 %222
      %224 = vrot.lane.b32.xlu0 %v124, 96
      %v225 = vpop.permute.xlu0 %224
      %226 = vrot.lane.b32.xlu0 %v125, 96
      %v227 = vpop.permute.xlu0 %226
      %228 = vrot.lane.b32.xlu0 %v126, 96
      %v229 = vpop.permute.xlu0 %228
      %230 = vrot.lane.b32.xlu0 %v127, 96
      %v231 = vpop.permute.xlu0 %230
      %232 = vrot.lane.b32.xlu0 %v128, 96
      %v233 = vpop.permute.xlu0 %232
      %234 = vrot.lane.b32.xlu0 %v129, 96
      %v235 = vpop.permute.xlu0 %234
      %236 = vrot.lane.b32.xlu0 %v130, 96
      %v237 = vpop.permute.xlu0 %236
      %238 = vrot.lane.b32.xlu0 %v131, 96
      %v239 = vpop.permute.xlu0 %238
      %240 = vrot.lane.b32.xlu0 %v132, 96
      %v241 = vpop.permute.xlu0 %240
      %242 = vrot.lane.b32.xlu0 %v133, 96
      %v243 = vpop.permute.xlu0 %242
      %244 = vrot.lane.b32.xlu0 %v134, 96
      %v245 = vpop.permute.xlu0 %244
      %246 = vrot.lane.b32.xlu0 %v135, 96
      %v247 = vpop.permute.xlu0 %246
      %248 = vrot.lane.b32.xlu0 %v136, 96
      %v249 = vpop.permute.xlu0 %248
      %250 = vrot.lane.b32.xlu0 %v137, 96
      %v251 = vpop.permute.xlu0 %250
      %252 = vrot.lane.b32.xlu0 %v138, 96
      %v253 = vpop.permute.xlu0 %252
      %254 = vrot.lane.b32.xlu0 %v139, 96
      %v255 = vpop.permute.xlu0 %254
      %256 = vrot.lane.b32.xlu0 %v140, 96
      %v257 = vpop.permute.xlu0 %256
      %258 = vrot.lane.b32.xlu0 %v141, 96
      %v259 = vpop.permute.xlu0 %258
      %260 = vrot.lane.b32.xlu0 %v142, 96
      %v261 = vpop.permute.xlu0 %260
      %262 = vrot.lane.b32.xlu0 %v143, 96
      %v263 = vpop.permute.xlu0 %262
      %264 = vrot.lane.b32.xlu0 %v144, 96
      %v265 = vpop.permute.xlu0 %264
      %266 = vrot.lane.b32.xlu0 %v145, 96
      %v267 = vpop.permute.xlu0 %266
      %268 = vrot.lane.b32.xlu0 %v146, 96
      %v269 = vpop.permute.xlu0 %268
      %270 = vrot.lane.b32.xlu0 %v147, 96
      %v271 = vpop.permute.xlu0 %270
      %272 = vrot.lane.b32.xlu0 %v148, 96
      %v273 = vpop.permute.xlu0 %272
      %274 = vrot.lane.b32.xlu0 %v149, 96
      %v275 = vpop.permute.xlu0 %274
      %276 = vrot.lane.b32.xlu0 %v150, 96
      %v277 = vpop.permute.xlu0 %276
      %278 = vrot.lane.b32.xlu0 %v151, 96
      %v279 = vpop.permute.xlu0 %278
      %v312 = vadd.f32 %v120, %v217
      %v313 = vadd.f32 %v121, %v219
      %v314 = vadd.f32 %v122, %v221
      %v315 = vadd.f32 %v123, %v223
      %v316 = vadd.f32 %v124, %v225
      %v317 = vadd.f32 %v125, %v227
      %v318 = vadd.f32 %v126, %v229
      %v319 = vadd.f32 %v127, %v231
      %v320 = vadd.f32 %v128, %v233
      %v321 = vadd.f32 %v129, %v235
      %v322 = vadd.f32 %v130, %v237
      %v323 = vadd.f32 %v131, %v239
      %v324 = vadd.f32 %v132, %v241
      %v325 = vadd.f32 %v133, %v243
      %v326 = vadd.f32 %v134, %v245
      %v327 = vadd.f32 %v135, %v247
      %v328 = vadd.f32 %v136, %v249
      %v329 = vadd.f32 %v137, %v251
      %v330 = vadd.f32 %v138, %v253
      %v331 = vadd.f32 %v139, %v255
      %v332 = vadd.f32 %v140, %v257
      %v333 = vadd.f32 %v141, %v259
      %v334 = vadd.f32 %v142, %v261
      %v335 = vadd.f32 %v143, %v263
      %v336 = vadd.f32 %v144, %v265
      %v337 = vadd.f32 %v145, %v267
      %v338 = vadd.f32 %v146, %v269
      %v339 = vadd.f32 %v147, %v271
      %v340 = vadd.f32 %v148, %v273
      %v341 = vadd.f32 %v149, %v275
      %v342 = vadd.f32 %v150, %v277
      %v343 = vadd.f32 %v151, %v279
      %376 = vrot.lane.b32.xlu0 %v152, 96
      %v377 = vpop.permute.xlu0 %376
      %378 = vrot.lane.b32.xlu0 %v153, 96
      %v379 = vpop.permute.xlu0 %378
      %380 = vrot.lane.b32.xlu0 %v154, 96
      %v381 = vpop.permute.xlu0 %380
      %382 = vrot.lane.b32.xlu0 %v155, 96
      %v383 = vpop.permute.xlu0 %382
      %384 = vrot.lane.b32.xlu0 %v156, 96
      %v385 = vpop.permute.xlu0 %384
      %386 = vrot.lane.b32.xlu0 %v157, 96
      %v387 = vpop.permute.xlu0 %386
      %388 = vrot.lane.b32.xlu0 %v158, 96
      %v389 = vpop.permute.xlu0 %388
      %390 = vrot.lane.b32.xlu0 %v159, 96
      %v391 = vpop.permute.xlu0 %390
      %392 = vrot.lane.b32.xlu0 %v160, 96
      %v393 = vpop.permute.xlu0 %392
      %394 = vrot.lane.b32.xlu0 %v161, 96
      %v395 = vpop.permute.xlu0 %394
      %396 = vrot.lane.b32.xlu0 %v162, 96
      %v397 = vpop.permute.xlu0 %396
      %398 = vrot.lane.b32.xlu0 %v163, 96
      %v399 = vpop.permute.xlu0 %398
      %400 = vrot.lane.b32.xlu0 %v164, 96
      %v401 = vpop.permute.xlu0 %400
      %402 = vrot.lane.b32.xlu0 %v165, 96
      %v403 = vpop.permute.xlu0 %402
      %404 = vrot.lane.b32.xlu0 %v166, 96
      %v405 = vpop.permute.xlu0 %404
      %406 = vrot.lane.b32.xlu0 %v167, 96
      %v407 = vpop.permute.xlu0 %406
      %408 = vrot.lane.b32.xlu0 %v168, 96
      %v409 = vpop.permute.xlu0 %408
      %410 = vrot.lane.b32.xlu0 %v169, 96
      %v411 = vpop.permute.xlu0 %410
      %412 = vrot.lane.b32.xlu0 %v170, 96
      %v413 = vpop.permute.xlu0 %412
      %414 = vrot.lane.b32.xlu0 %v171, 96
      %v415 = vpop.permute.xlu0 %414
      %416 = vrot.lane.b32.xlu0 %v172, 96
      %v417 = vpop.permute.xlu0 %416
      %418 = vrot.lane.b32.xlu0 %v173, 96
      %v419 = vpop.permute.xlu0 %418
      %420 = vrot.lane.b32.xlu0 %v174, 96
      %v421 = vpop.permute.xlu0 %420
      %422 = vrot.lane.b32.xlu0 %v175, 96
      %v423 = vpop.permute.xlu0 %422
      %424 = vrot.lane.b32.xlu0 %v176, 96
      %v425 = vpop.permute.xlu0 %424
      %426 = vrot.lane.b32.xlu0 %v177, 96
      %v427 = vpop.permute.xlu0 %426
      %428 = vrot.lane.b32.xlu0 %v178, 96
      %v429 = vpop.permute.xlu0 %428
      %430 = vrot.lane.b32.xlu0 %v179, 96
      %v431 = vpop.permute.xlu0 %430
      %432 = vrot.lane.b32.xlu0 %v180, 96
      %v433 = vpop.permute.xlu0 %432
      %434 = vrot.lane.b32.xlu0 %v181, 96
      %v435 = vpop.permute.xlu0 %434
      %436 = vrot.lane.b32.xlu0 %v182, 96
      %v437 = vpop.permute.xlu0 %436
      %438 = vrot.lane.b32.xlu0 %v183, 96
      %v439 = vpop.permute.xlu0 %438
      %v472 = vadd.f32 %v152, %v377
      %v473 = vadd.f32 %v153, %v379
      %v474 = vadd.f32 %v154, %v381
      %v475 = vadd.f32 %v155, %v383
      %v476 = vadd.f32 %v156, %v385
      %v477 = vadd.f32 %v157, %v387
      %v478 = vadd.f32 %v158, %v389
      %v479 = vadd.f32 %v159, %v391
      %v480 = vadd.f32 %v160, %v393
      %v481 = vadd.f32 %v161, %v395
      %v482 = vadd.f32 %v162, %v397
      %v483 = vadd.f32 %v163, %v399
      %v484 = vadd.f32 %v164, %v401
      %v485 = vadd.f32 %v165, %v403
      %v486 = vadd.f32 %v166, %v405
      %v487 = vadd.f32 %v167, %v407
      %v488 = vadd.f32 %v168, %v409
      %v489 = vadd.f32 %v169, %v411
      %v490 = vadd.f32 %v170, %v413
      %v491 = vadd.f32 %v171, %v415
      %v492 = vadd.f32 %v172, %v417
      %v493 = vadd.f32 %v173, %v419
      %v494 = vadd.f32 %v174, %v421
      %v495 = vadd.f32 %v175, %v423
      %v496 = vadd.f32 %v176, %v425
      %v497 = vadd.f32 %v177, %v427
      %v498 = vadd.f32 %v178, %v429
      %v499 = vadd.f32 %v179, %v431
      %v500 = vadd.f32 %v180, %v433
      %v501 = vadd.f32 %v181, %v435
      %v502 = vadd.f32 %v182, %v437
      %v503 = vadd.f32 %v183, %v439
      %504 = vrot.lane.b32.xlu0 %v120, 64
      %v505 = vpop.permute.xlu0 %504
      %506 = vrot.lane.b32.xlu0 %v121, 64
      %v507 = vpop.permute.xlu0 %506
      %508 = vrot.lane.b32.xlu0 %v122, 64
      %v509 = vpop.permute.xlu0 %508
      %510 = vrot.lane.b32.xlu0 %v123, 64
      %v511 = vpop.permute.xlu0 %510
      %512 = vrot.lane.b32.xlu0 %v124, 64
      %v513 = vpop.permute.xlu0 %512
      %514 = vrot.lane.b32.xlu0 %v125, 64
      %v515 = vpop.permute.xlu0 %514
      %516 = vrot.lane.b32.xlu0 %v126, 64
      %v517 = vpop.permute.xlu0 %516
      %518 = vrot.lane.b32.xlu0 %v127, 64
      %v519 = vpop.permute.xlu0 %518
      %520 = vrot.lane.b32.xlu0 %v128, 64
      %v521 = vpop.permute.xlu0 %520
      %522 = vrot.lane.b32.xlu0 %v129, 64
      %v523 = vpop.permute.xlu0 %522
      %524 = vrot.lane.b32.xlu0 %v130, 64
      %v525 = vpop.permute.xlu0 %524
      %526 = vrot.lane.b32.xlu0 %v131, 64
      %v527 = vpop.permute.xlu0 %526
      %528 = vrot.lane.b32.xlu0 %v132, 64
      %v529 = vpop.permute.xlu0 %528
      %530 = vrot.lane.b32.xlu0 %v133, 64
      %v531 = vpop.permute.xlu0 %530
      %532 = vrot.lane.b32.xlu0 %v134, 64
      %v533 = vpop.permute.xlu0 %532
      %534 = vrot.lane.b32.xlu0 %v135, 64
      %v535 = vpop.permute.xlu0 %534
      %536 = vrot.lane.b32.xlu0 %v136, 64
      %v537 = vpop.permute.xlu0 %536
      %538 = vrot.lane.b32.xlu0 %v137, 64
      %v539 = vpop.permute.xlu0 %538
      %540 = vrot.lane.b32.xlu0 %v138, 64
      %v541 = vpop.permute.xlu0 %540
      %542 = vrot.lane.b32.xlu0 %v139, 64
      %v543 = vpop.permute.xlu0 %542
      %544 = vrot.lane.b32.xlu0 %v140, 64
      %v545 = vpop.permute.xlu0 %544
      %546 = vrot.lane.b32.xlu0 %v141, 64
      %v547 = vpop.permute.xlu0 %546
      %548 = vrot.lane.b32.xlu0 %v142, 64
      %v549 = vpop.permute.xlu0 %548
      %550 = vrot.lane.b32.xlu0 %v143, 64
      %v551 = vpop.permute.xlu0 %550
      %552 = vrot.lane.b32.xlu0 %v144, 64
      %v553 = vpop.permute.xlu0 %552
      %554 = vrot.lane.b32.xlu0 %v145, 64
      %v555 = vpop.permute.xlu0 %554
      %556 = vrot.lane.b32.xlu0 %v146, 64
      %v557 = vpop.permute.xlu0 %556
      %558 = vrot.lane.b32.xlu0 %v147, 64
      %v559 = vpop.permute.xlu0 %558
      %560 = vrot.lane.b32.xlu0 %v148, 64
      %v561 = vpop.permute.xlu0 %560
      %562 = vrot.lane.b32.xlu0 %v149, 64
      %v563 = vpop.permute.xlu0 %562
      %564 = vrot.lane.b32.xlu0 %v150, 64
      %v565 = vpop.permute.xlu0 %564
      %566 = vrot.lane.b32.xlu0 %v151, 64
      %v567 = vpop.permute.xlu0 %566
      %v600 = vadd.f32 %v312, %v505
      %v601 = vadd.f32 %v313, %v507
      %v602 = vadd.f32 %v314, %v509
      %v603 = vadd.f32 %v315, %v511
      %v604 = vadd.f32 %v316, %v513
      %v605 = vadd.f32 %v317, %v515
      %v606 = vadd.f32 %v318, %v517
      %v607 = vadd.f32 %v319, %v519
      %v608 = vadd.f32 %v320, %v521
      %v609 = vadd.f32 %v321, %v523
      %v610 = vadd.f32 %v322, %v525
      %v611 = vadd.f32 %v323, %v527
      %v612 = vadd.f32 %v324, %v529
      %v613 = vadd.f32 %v325, %v531
      %v614 = vadd.f32 %v326, %v533
      %v615 = vadd.f32 %v327, %v535
      %v616 = vadd.f32 %v328, %v537
      %v617 = vadd.f32 %v329, %v539
      %v618 = vadd.f32 %v330, %v541
      %v619 = vadd.f32 %v331, %v543
      %v620 = vadd.f32 %v332, %v545
      %v621 = vadd.f32 %v333, %v547
      %v622 = vadd.f32 %v334, %v549
      %v623 = vadd.f32 %v335, %v551
      %v624 = vadd.f32 %v336, %v553
      %v625 = vadd.f32 %v337, %v555
      %v626 = vadd.f32 %v338, %v557
      %v627 = vadd.f32 %v339, %v559
      %v628 = vadd.f32 %v340, %v561
      %v629 = vadd.f32 %v341, %v563
      %v630 = vadd.f32 %v342, %v565
      %v631 = vadd.f32 %v343, %v567
      %632 = vrot.lane.b32.xlu0 %v152, 64
      %v633 = vpop.permute.xlu0 %632
      %634 = vrot.lane.b32.xlu0 %v153, 64
      %v635 = vpop.permute.xlu0 %634
      %636 = vrot.lane.b32.xlu0 %v154, 64
      %v637 = vpop.permute.xlu0 %636
      %638 = vrot.lane.b32.xlu0 %v155, 64
      %v639 = vpop.permute.xlu0 %638
      %640 = vrot.lane.b32.xlu0 %v156, 64
      %v641 = vpop.permute.xlu0 %640
      %642 = vrot.lane.b32.xlu0 %v157, 64
      %v643 = vpop.permute.xlu0 %642
      %644 = vrot.lane.b32.xlu0 %v158, 64
      %v645 = vpop.permute.xlu0 %644
      %646 = vrot.lane.b32.xlu0 %v159, 64
      %v647 = vpop.permute.xlu0 %646
      %648 = vrot.lane.b32.xlu0 %v160, 64
      %v649 = vpop.permute.xlu0 %648
      %650 = vrot.lane.b32.xlu0 %v161, 64
      %v651 = vpop.permute.xlu0 %650
      %652 = vrot.lane.b32.xlu0 %v162, 64
      %v653 = vpop.permute.xlu0 %652
      %654 = vrot.lane.b32.xlu0 %v163, 64
      %v655 = vpop.permute.xlu0 %654
      %656 = vrot.lane.b32.xlu0 %v164, 64
      %v657 = vpop.permute.xlu0 %656
      %658 = vrot.lane.b32.xlu0 %v165, 64
      %v659 = vpop.permute.xlu0 %658
      %660 = vrot.lane.b32.xlu0 %v166, 64
      %v661 = vpop.permute.xlu0 %660
      %662 = vrot.lane.b32.xlu0 %v167, 64
      %v663 = vpop.permute.xlu0 %662
      %664 = vrot.lane.b32.xlu0 %v168, 64
      %v665 = vpop.permute.xlu0 %664
      %666 = vrot.lane.b32.xlu0 %v169, 64
      %v667 = vpop.permute.xlu0 %666
      %668 = vrot.lane.b32.xlu0 %v170, 64
      %v669 = vpop.permute.xlu0 %668
      %670 = vrot.lane.b32.xlu0 %v171, 64
      %v671 = vpop.permute.xlu0 %670
      %672 = vrot.lane.b32.xlu0 %v172, 64
      %v673 = vpop.permute.xlu0 %672
      %674 = vrot.lane.b32.xlu0 %v173, 64
      %v675 = vpop.permute.xlu0 %674
      %676 = vrot.lane.b32.xlu0 %v174, 64
      %v677 = vpop.permute.xlu0 %676
      %678 = vrot.lane.b32.xlu0 %v175, 64
      %v679 = vpop.permute.xlu0 %678
      %680 = vrot.lane.b32.xlu0 %v176, 64
      %v681 = vpop.permute.xlu0 %680
      %682 = vrot.lane.b32.xlu0 %v177, 64
      %v683 = vpop.permute.xlu0 %682
      %684 = vrot.lane.b32.xlu0 %v178, 64
      %v685 = vpop.permute.xlu0 %684
      %686 = vrot.lane.b32.xlu0 %v179, 64
      %v687 = vpop.permute.xlu0 %686
      %688 = vrot.lane.b32.xlu0 %v180, 64
      %v689 = vpop.permute.xlu0 %688
      %690 = vrot.lane.b32.xlu0 %v181, 64
      %v691 = vpop.permute.xlu0 %690
      %692 = vrot.lane.b32.xlu0 %v182, 64
      %v693 = vpop.permute.xlu0 %692
      %694 = vrot.lane.b32.xlu0 %v183, 64
      %v695 = vpop.permute.xlu0 %694
      %v728 = vadd.f32 %v472, %v633
      %v729 = vadd.f32 %v473, %v635
      %v730 = vadd.f32 %v474, %v637
      %v731 = vadd.f32 %v475, %v639
      %v732 = vadd.f32 %v476, %v641
      %v733 = vadd.f32 %v477, %v643
      %v734 = vadd.f32 %v478, %v645
      %v735 = vadd.f32 %v479, %v647
      %v736 = vadd.f32 %v480, %v649
      %v737 = vadd.f32 %v481, %v651
      %v738 = vadd.f32 %v482, %v653
      %v739 = vadd.f32 %v483, %v655
      %v740 = vadd.f32 %v484, %v657
      %v741 = vadd.f32 %v485, %v659
      %v742 = vadd.f32 %v486, %v661
      %v743 = vadd.f32 %v487, %v663
      %v744 = vadd.f32 %v488, %v665
      %v745 = vadd.f32 %v489, %v667
      %v746 = vadd.f32 %v490, %v669
      %v747 = vadd.f32 %v491, %v671
      %v748 = vadd.f32 %v492, %v673
      %v749 = vadd.f32 %v493, %v675
      %v750 = vadd.f32 %v494, %v677
      %v751 = vadd.f32 %v495, %v679
      %v752 = vadd.f32 %v496, %v681
      %v753 = vadd.f32 %v497, %v683
      %v754 = vadd.f32 %v498, %v685
      %v755 = vadd.f32 %v499, %v687
      %v756 = vadd.f32 %v500, %v689
      %v757 = vadd.f32 %v501, %v691
      %v758 = vadd.f32 %v502, %v693
      %v759 = vadd.f32 %v503, %v695
      %760 = vrot.lane.b32.xlu0 %v120, 32
      %v761 = vpop.permute.xlu0 %760
      %762 = vrot.lane.b32.xlu0 %v121, 32
      %v763 = vpop.permute.xlu0 %762
      %764 = vrot.lane.b32.xlu0 %v122, 32
      %v765 = vpop.permute.xlu0 %764
      %766 = vrot.lane.b32.xlu0 %v123, 32
      %v767 = vpop.permute.xlu0 %766
      %768 = vrot.lane.b32.xlu0 %v124, 32
      %v769 = vpop.permute.xlu0 %768
      %770 = vrot.lane.b32.xlu0 %v125, 32
      %v771 = vpop.permute.xlu0 %770
      %772 = vrot.lane.b32.xlu0 %v126, 32
      %v773 = vpop.permute.xlu0 %772
      %774 = vrot.lane.b32.xlu0 %v127, 32
      %v775 = vpop.permute.xlu0 %774
      %776 = vrot.lane.b32.xlu0 %v128, 32
      %v777 = vpop.permute.xlu0 %776
      %778 = vrot.lane.b32.xlu0 %v129, 32
      %v779 = vpop.permute.xlu0 %778
      %780 = vrot.lane.b32.xlu0 %v130, 32
      %v781 = vpop.permute.xlu0 %780
      %782 = vrot.lane.b32.xlu0 %v131, 32
      %v783 = vpop.permute.xlu0 %782
      %784 = vrot.lane.b32.xlu0 %v132, 32
      %v785 = vpop.permute.xlu0 %784
      %786 = vrot.lane.b32.xlu0 %v133, 32
      %v787 = vpop.permute.xlu0 %786
      %788 = vrot.lane.b32.xlu0 %v134, 32
      %v789 = vpop.permute.xlu0 %788
      %790 = vrot.lane.b32.xlu0 %v135, 32
      %v791 = vpop.permute.xlu0 %790
      %792 = vrot.lane.b32.xlu0 %v136, 32
      %v793 = vpop.permute.xlu0 %792
      %794 = vrot.lane.b32.xlu0 %v137, 32
      %v795 = vpop.permute.xlu0 %794
      %796 = vrot.lane.b32.xlu0 %v138, 32
      %v797 = vpop.permute.xlu0 %796
      %798 = vrot.lane.b32.xlu0 %v139, 32
      %v799 = vpop.permute.xlu0 %798
      %800 = vrot.lane.b32.xlu0 %v140, 32
      %v801 = vpop.permute.xlu0 %800
      %802 = vrot.lane.b32.xlu0 %v141, 32
      %v803 = vpop.permute.xlu0 %802
      %804 = vrot.lane.b32.xlu0 %v142, 32
      %v805 = vpop.permute.xlu0 %804
      %806 = vrot.lane.b32.xlu0 %v143, 32
      %v807 = vpop.permute.xlu0 %806
      %808 = vrot.lane.b32.xlu0 %v144, 32
      %v809 = vpop.permute.xlu0 %808
      %810 = vrot.lane.b32.xlu0 %v145, 32
      %v811 = vpop.permute.xlu0 %810
      %812 = vrot.lane.b32.xlu0 %v146, 32
      %v813 = vpop.permute.xlu0 %812
      %814 = vrot.lane.b32.xlu0 %v147, 32
      %v815 = vpop.permute.xlu0 %814
      %816 = vrot.lane.b32.xlu0 %v148, 32
      %v817 = vpop.permute.xlu0 %816
      %818 = vrot.lane.b32.xlu0 %v149, 32
      %v819 = vpop.permute.xlu0 %818
      %820 = vrot.lane.b32.xlu0 %v150, 32
      %v821 = vpop.permute.xlu0 %820
      %822 = vrot.lane.b32.xlu0 %v151, 32
      %v823 = vpop.permute.xlu0 %822
      %v856 = vadd.f32 %v600, %v761
      %v857 = vadd.f32 %v601, %v763
      %v858 = vadd.f32 %v602, %v765
      %v859 = vadd.f32 %v603, %v767
      %v860 = vadd.f32 %v604, %v769
      %v861 = vadd.f32 %v605, %v771
      %v862 = vadd.f32 %v606, %v773
      %v863 = vadd.f32 %v607, %v775
      %v864 = vadd.f32 %v608, %v777
      %v865 = vadd.f32 %v609, %v779
      %v866 = vadd.f32 %v610, %v781
      %v867 = vadd.f32 %v611, %v783
      %v868 = vadd.f32 %v612, %v785
      %v869 = vadd.f32 %v613, %v787
      %v870 = vadd.f32 %v614, %v789
      %v871 = vadd.f32 %v615, %v791
      %v872 = vadd.f32 %v616, %v793
      %v873 = vadd.f32 %v617, %v795
      %v874 = vadd.f32 %v618, %v797
      %v875 = vadd.f32 %v619, %v799
      %v876 = vadd.f32 %v620, %v801
      %v877 = vadd.f32 %v621, %v803
      %v878 = vadd.f32 %v622, %v805
      %v879 = vadd.f32 %v623, %v807
      %v880 = vadd.f32 %v624, %v809
      %v881 = vadd.f32 %v625, %v811
      %v882 = vadd.f32 %v626, %v813
      %v883 = vadd.f32 %v627, %v815
      %v884 = vadd.f32 %v628, %v817
      %v885 = vadd.f32 %v629, %v819
      %v886 = vadd.f32 %v630, %v821
      %v887 = vadd.f32 %v631, %v823
      %888 = vrot.lane.b32.xlu0 %v152, 32
      %v889 = vpop.permute.xlu0 %888
      %890 = vrot.lane.b32.xlu0 %v153, 32
      %v891 = vpop.permute.xlu0 %890
      %892 = vrot.lane.b32.xlu0 %v154, 32
      %v893 = vpop.permute.xlu0 %892
      %894 = vrot.lane.b32.xlu0 %v155, 32
      %v895 = vpop.permute.xlu0 %894
      %896 = vrot.lane.b32.xlu0 %v156, 32
      %v897 = vpop.permute.xlu0 %896
      %898 = vrot.lane.b32.xlu0 %v157, 32
      %v899 = vpop.permute.xlu0 %898
      %900 = vrot.lane.b32.xlu0 %v158, 32
      %v901 = vpop.permute.xlu0 %900
      %902 = vrot.lane.b32.xlu0 %v159, 32
      %v903 = vpop.permute.xlu0 %902
      %904 = vrot.lane.b32.xlu0 %v160, 32
      %v905 = vpop.permute.xlu0 %904
      %906 = vrot.lane.b32.xlu0 %v161, 32
      %v907 = vpop.permute.xlu0 %906
      %908 = vrot.lane.b32.xlu0 %v162, 32
      %v909 = vpop.permute.xlu0 %908
      %910 = vrot.lane.b32.xlu0 %v163, 32
      %v911 = vpop.permute.xlu0 %910
      %912 = vrot.lane.b32.xlu0 %v164, 32
      %v913 = vpop.permute.xlu0 %912
      %914 = vrot.lane.b32.xlu0 %v165, 32
      %v915 = vpop.permute.xlu0 %914
      %916 = vrot.lane.b32.xlu0 %v166, 32
      %v917 = vpop.permute.xlu0 %916
      %918 = vrot.lane.b32.xlu0 %v167, 32
      %v919 = vpop.permute.xlu0 %918
      %920 = vrot.lane.b32.xlu0 %v168, 32
      %v921 = vpop.permute.xlu0 %920
      %922 = vrot.lane.b32.xlu0 %v169, 32
      %v923 = vpop.permute.xlu0 %922
      %924 = vrot.lane.b32.xlu0 %v170, 32
      %v925 = vpop.permute.xlu0 %924
      %926 = vrot.lane.b32.xlu0 %v171, 32
      %v927 = vpop.permute.xlu0 %926
      %928 = vrot.lane.b32.xlu0 %v172, 32
      %v929 = vpop.permute.xlu0 %928
      %930 = vrot.lane.b32.xlu0 %v173, 32
      %v931 = vpop.permute.xlu0 %930
      %932 = vrot.lane.b32.xlu0 %v174, 32
      %v933 = vpop.permute.xlu0 %932
      %934 = vrot.lane.b32.xlu0 %v175, 32
      %v935 = vpop.permute.xlu0 %934
      %936 = vrot.lane.b32.xlu0 %v176, 32
      %v937 = vpop.permute.xlu0 %936
      %938 = vrot.lane.b32.xlu0 %v177, 32
      %v939 = vpop.permute.xlu0 %938
      %940 = vrot.lane.b32.xlu0 %v178, 32
      %v941 = vpop.permute.xlu0 %940
      %942 = vrot.lane.b32.xlu0 %v179, 32
      %v943 = vpop.permute.xlu0 %942
      %944 = vrot.lane.b32.xlu0 %v180, 32
      %v945 = vpop.permute.xlu0 %944
      %946 = vrot.lane.b32.xlu0 %v181, 32
      %v947 = vpop.permute.xlu0 %946
      %948 = vrot.lane.b32.xlu0 %v182, 32
      %v949 = vpop.permute.xlu0 %948
      %950 = vrot.lane.b32.xlu0 %v183, 32
      %v951 = vpop.permute.xlu0 %950
      %v984 = vadd.f32 %v728, %v889
      %v985 = vadd.f32 %v729, %v891
      %v986 = vadd.f32 %v730, %v893
      %v987 = vadd.f32 %v731, %v895
      %v988 = vadd.f32 %v732, %v897
      %v989 = vadd.f32 %v733, %v899
      %v990 = vadd.f32 %v734, %v901
      %v991 = vadd.f32 %v735, %v903
      %v992 = vadd.f32 %v736, %v905
      %v993 = vadd.f32 %v737, %v907
      %v994 = vadd.f32 %v738, %v909
      %v995 = vadd.f32 %v739, %v911
      %v996 = vadd.f32 %v740, %v913
      %v997 = vadd.f32 %v741, %v915
      %v998 = vadd.f32 %v742, %v917
      %v999 = vadd.f32 %v743, %v919
      %v1000 = vadd.f32 %v744, %v921
      %v1001 = vadd.f32 %v745, %v923
      %v1002 = vadd.f32 %v746, %v925
      %v1003 = vadd.f32 %v747, %v927
      %v1004 = vadd.f32 %v748, %v929
      %v1005 = vadd.f32 %v749, %v931
      %v1006 = vadd.f32 %v750, %v933
      %v1007 = vadd.f32 %v751, %v935
      %v1008 = vadd.f32 %v752, %v937
      %v1009 = vadd.f32 %v753, %v939
      %v1010 = vadd.f32 %v754, %v941
      %v1011 = vadd.f32 %v755, %v943
      %v1012 = vadd.f32 %v756, %v945
      %v1013 = vadd.f32 %v757, %v947
      %v1014 = vadd.f32 %v758, %v949
      %v1015 = vadd.f32 %v759, %v951
      %v1016 = vmul.f32 %v856, %v856
      %v1017 = vmul.f32 %v857, %v857
      %v1018 = vmul.f32 %v858, %v858
      %v1019 = vmul.f32 %v859, %v859
      %v1020 = vmul.f32 %v860, %v860
      %v1021 = vmul.f32 %v861, %v861
      %v1022 = vmul.f32 %v862, %v862
      %v1023 = vmul.f32 %v863, %v863
      %v1024 = vmul.f32 %v864, %v864
      %v1025 = vmul.f32 %v865, %v865
      %v1026 = vmul.f32 %v866, %v866
      %v1027 = vmul.f32 %v867, %v867
      %v1028 = vmul.f32 %v868, %v868
      %v1029 = vmul.f32 %v869, %v869
      %v1030 = vmul.f32 %v870, %v870
      %v1031 = vmul.f32 %v871, %v871
      %v1032 = vmul.f32 %v872, %v872
      %v1033 = vmul.f32 %v873, %v873
      %v1034 = vmul.f32 %v874, %v874
      %v1035 = vmul.f32 %v875, %v875
      %v1036 = vmul.f32 %v876, %v876
      %v1037 = vmul.f32 %v877, %v877
      %v1038 = vmul.f32 %v878, %v878
      %v1039 = vmul.f32 %v879, %v879
      %v1040 = vmul.f32 %v880, %v880
      %v1041 = vmul.f32 %v881, %v881
      %v1042 = vmul.f32 %v882, %v882
      %v1043 = vmul.f32 %v883, %v883
      %v1044 = vmul.f32 %v884, %v884
      %v1045 = vmul.f32 %v885, %v885
      %v1046 = vmul.f32 %v886, %v886
      %v1047 = vmul.f32 %v887, %v887
      %v1048 = vsub.f32 %v1016, %v984
      %v1049 = vsub.f32 %v1017, %v985
      %v1050 = vsub.f32 %v1018, %v986
      %v1051 = vsub.f32 %v1019, %v987
      %v1052 = vsub.f32 %v1020, %v988
      %v1053 = vsub.f32 %v1021, %v989
      %v1054 = vsub.f32 %v1022, %v990
      %v1055 = vsub.f32 %v1023, %v991
      %v1056 = vsub.f32 %v1024, %v992
      %v1057 = vsub.f32 %v1025, %v993
      %v1058 = vsub.f32 %v1026, %v994
      %v1059 = vsub.f32 %v1027, %v995
      %v1060 = vsub.f32 %v1028, %v996
      %v1061 = vsub.f32 %v1029, %v997
      %v1062 = vsub.f32 %v1030, %v998
      %v1063 = vsub.f32 %v1031, %v999
      %v1064 = vsub.f32 %v1032, %v1000
      %v1065 = vsub.f32 %v1033, %v1001
      %v1066 = vsub.f32 %v1034, %v1002
      %v1067 = vsub.f32 %v1035, %v1003
      %v1068 = vsub.f32 %v1036, %v1004
      %v1069 = vsub.f32 %v1037, %v1005
      %v1070 = vsub.f32 %v1038, %v1006
      %v1071 = vsub.f32 %v1039, %v1007
      %v1072 = vsub.f32 %v1040, %v1008
      %v1073 = vsub.f32 %v1041, %v1009
      %v1074 = vsub.f32 %v1042, %v1010
      %v1075 = vsub.f32 %v1043, %v1011
      %v1076 = vsub.f32 %v1044, %v1012
      %v1077 = vsub.f32 %v1045, %v1013
      %v1078 = vsub.f32 %v1046, %v1014
      %v1079 = vsub.f32 %v1047, %v1015
      %v1080 = vmul.f32 %v1048, 0.5
      %v1081 = vmul.f32 %v1049, 0.5
      %v1082 = vmul.f32 %v1050, 0.5
      %v1083 = vmul.f32 %v1051, 0.5
      %v1084 = vmul.f32 %v1052, 0.5
      %v1085 = vmul.f32 %v1053, 0.5
      %v1086 = vmul.f32 %v1054, 0.5
      %v1087 = vmul.f32 %v1055, 0.5
      %v1088 = vmul.f32 %v1056, 0.5
      %v1089 = vmul.f32 %v1057, 0.5
      %v1090 = vmul.f32 %v1058, 0.5
      %v1091 = vmul.f32 %v1059, 0.5
      %v1092 = vmul.f32 %v1060, 0.5
      %v1093 = vmul.f32 %v1061, 0.5
      %v1094 = vmul.f32 %v1062, 0.5
      %v1095 = vmul.f32 %v1063, 0.5
      %v1096 = vmul.f32 %v1064, 0.5
      %v1097 = vmul.f32 %v1065, 0.5
      %v1098 = vmul.f32 %v1066, 0.5
      %v1099 = vmul.f32 %v1067, 0.5
      %v1100 = vmul.f32 %v1068, 0.5
      %v1101 = vmul.f32 %v1069, 0.5
      %v1102 = vmul.f32 %v1070, 0.5
      %v1103 = vmul.f32 %v1071, 0.5
      %v1104 = vmul.f32 %v1072, 0.5
      %v1105 = vmul.f32 %v1073, 0.5
      %v1106 = vmul.f32 %v1074, 0.5
      %v1107 = vmul.f32 %v1075, 0.5
      %v1108 = vmul.f32 %v1076, 0.5
      %v1109 = vmul.f32 %v1077, 0.5
      %v1110 = vmul.f32 %v1078, 0.5
      %v1111 = vmul.f32 %v1079, 0.5
      %vm1112 = vcmask 261120
      %v1113 = vsel %vm1112, %v1080, 0.0
      %1114 = vadd.xlane.f32.xlu0 %v1113
      %v1115 = vpop.xlane.xlu0 %1114
      %v1116 = vsel %vm1112, %v1081, 0.0
      %1117 = vadd.xlane.f32.xlu0 %v1116
      %v1118 = vpop.xlane.xlu0 %1117
      %v1119 = vsel %vm1112, %v1082, 0.0
      %1120 = vadd.xlane.f32.xlu0 %v1119
      %v1121 = vpop.xlane.xlu0 %1120
      %v1122 = vsel %vm1112, %v1083, 0.0
      %1123 = vadd.xlane.f32.xlu0 %v1122
      %v1124 = vpop.xlane.xlu0 %1123
      %v1125 = vsel %vm1112, %v1084, 0.0
      %1126 = vadd.xlane.f32.xlu0 %v1125
      %v1127 = vpop.xlane.xlu0 %1126
      %v1128 = vsel %vm1112, %v1085, 0.0
      %1129 = vadd.xlane.f32.xlu0 %v1128
      %v1130 = vpop.xlane.xlu0 %1129
      %v1131 = vsel %vm1112, %v1086, 0.0
      %1132 = vadd.xlane.f32.xlu0 %v1131
      %v1133 = vpop.xlane.xlu0 %1132
      %v1134 = vsel %vm1112, %v1087, 0.0
      %1135 = vadd.xlane.f32.xlu0 %v1134
      %v1136 = vpop.xlane.xlu0 %1135
      %v1137 = vsel %vm1112, %v1088, 0.0
      %1138 = vadd.xlane.f32.xlu0 %v1137
      %v1139 = vpop.xlane.xlu0 %1138
      %v1140 = vsel %vm1112, %v1089, 0.0
      %1141 = vadd.xlane.f32.xlu0 %v1140
      %v1142 = vpop.xlane.xlu0 %1141
      %v1143 = vsel %vm1112, %v1090, 0.0
      %1144 = vadd.xlane.f32.xlu0 %v1143
      %v1145 = vpop.xlane.xlu0 %1144
      %v1146 = vsel %vm1112, %v1091, 0.0
      %1147 = vadd.xlane.f32.xlu0 %v1146
      %v1148 = vpop.xlane.xlu0 %1147
      %v1149 = vsel %vm1112, %v1092, 0.0
      %1150 = vadd.xlane.f32.xlu0 %v1149
      %v1151 = vpop.xlane.xlu0 %1150
      %v1152 = vsel %vm1112, %v1093, 0.0
      %1153 = vadd.xlane.f32.xlu0 %v1152
      %v1154 = vpop.xlane.xlu0 %1153
      %v1155 = vsel %vm1112, %v1094, 0.0
      %1156 = vadd.xlane.f32.xlu0 %v1155
      %v1157 = vpop.xlane.xlu0 %1156
      %v1158 = vsel %vm1112, %v1095, 0.0
      %1159 = vadd.xlane.f32.xlu0 %v1158
      %v1160 = vpop.xlane.xlu0 %1159
      %v1161 = vsel %vm1112, %v1096, 0.0
      %1162 = vadd.xlane.f32.xlu0 %v1161
      %v1163 = vpop.xlane.xlu0 %1162
      %v1164 = vsel %vm1112, %v1097, 0.0
      %1165 = vadd.xlane.f32.xlu0 %v1164
      %v1166 = vpop.xlane.xlu0 %1165
      %v1167 = vsel %vm1112, %v1098, 0.0
      %1168 = vadd.xlane.f32.xlu0 %v1167
      %v1169 = vpop.xlane.xlu0 %1168
      %v1170 = vsel %vm1112, %v1099, 0.0
      %1171 = vadd.xlane.f32.xlu0 %v1170
      %v1172 = vpop.xlane.xlu0 %1171
      %v1173 = vsel %vm1112, %v1100, 0.0
      %1174 = vadd.xlane.f32.xlu0 %v1173
      %v1175 = vpop.xlane.xlu0 %1174
      %v1176 = vsel %vm1112, %v1101, 0.0
      %1177 = vadd.xlane.f32.xlu0 %v1176
      %v1178 = vpop.xlane.xlu0 %1177
      %v1179 = vsel %vm1112, %v1102, 0.0
      %1180 = vadd.xlane.f32.xlu0 %v1179
      %v1181 = vpop.xlane.xlu0 %1180
      %v1182 = vsel %vm1112, %v1103, 0.0
      %1183 = vadd.xlane.f32.xlu0 %v1182
      %v1184 = vpop.xlane.xlu0 %1183
      %v1185 = vsel %vm1112, %v1104, 0.0
      %1186 = vadd.xlane.f32.xlu0 %v1185
      %v1187 = vpop.xlane.xlu0 %1186
      %v1188 = vsel %vm1112, %v1105, 0.0
      %1189 = vadd.xlane.f32.xlu0 %v1188
      %v1190 = vpop.xlane.xlu0 %1189
      %v1191 = vsel %vm1112, %v1106, 0.0
      %1192 = vadd.xlane.f32.xlu0 %v1191
      %v1193 = vpop.xlane.xlu0 %1192
      %v1194 = vsel %vm1112, %v1107, 0.0
      %1195 = vadd.xlane.f32.xlu0 %v1194
      %v1196 = vpop.xlane.xlu0 %1195
      %v1197 = vsel %vm1112, %v1108, 0.0
      %1198 = vadd.xlane.f32.xlu0 %v1197
      %v1199 = vpop.xlane.xlu0 %1198
      %v1200 = vsel %vm1112, %v1109, 0.0
      %1201 = vadd.xlane.f32.xlu0 %v1200
      %v1202 = vpop.xlane.xlu0 %1201
      %v1203 = vsel %vm1112, %v1110, 0.0
      %1204 = vadd.xlane.f32.xlu0 %v1203
      %v1205 = vpop.xlane.xlu0 %1204
      %v1206 = vsel %vm1112, %v1111, 0.0
      %1207 = vadd.xlane.f32.xlu0 %v1206
      %v1208 = vpop.xlane.xlu0 %1207
      %vm1209 = vcmask 7168
      %1210 = vst.msk [vmem:[%s118] sm:$0xff] %vm1209, %v1115
      %1211 = vst.msk [vmem:[%s118 + $0x8] sm:$0xff] %vm1209, %v1118
      %1212 = vst.msk [vmem:[%s118 + $0x10] sm:$0xff] %vm1209, %v1121
      %1213 = vst.msk [vmem:[%s118 + $0x18] sm:$0xff] %vm1209, %v1124
      %1214 = vst.msk [vmem:[%s118 + $0x20] sm:$0xff] %vm1209, %v1127
      %1215 = vst.msk [vmem:[%s118 + $0x28] sm:$0xff] %vm1209, %v1130
      %1216 = vst.msk [vmem:[%s118 + $0x30] sm:$0xff] %vm1209, %v1133
      %1217 = vst.msk [vmem:[%s118 + $0x38] sm:$0xff] %vm1209, %v1136
      %1218 = vst.msk [vmem:[%s118 + $0x40] sm:$0xff] %vm1209, %v1139
      %1219 = vst.msk [vmem:[%s118 + $0x48] sm:$0xff] %vm1209, %v1142
      %1220 = vst.msk [vmem:[%s118 + $0x50] sm:$0xff] %vm1209, %v1145
      %1221 = vst.msk [vmem:[%s118 + $0x58] sm:$0xff] %vm1209, %v1148
      %1222 = vst.msk [vmem:[%s118 + $0x60] sm:$0xff] %vm1209, %v1151
      %1223 = vst.msk [vmem:[%s118 + $0x68] sm:$0xff] %vm1209, %v1154
      %1224 = vst.msk [vmem:[%s118 + $0x70] sm:$0xff] %vm1209, %v1157
      %1225 = vst.msk [vmem:[%s118 + $0x78] sm:$0xff] %vm1209, %v1160
      %1226 = vst.msk [vmem:[%s118 + $0x80] sm:$0xff] %vm1209, %v1163
      %1227 = vst.msk [vmem:[%s118 + $0x88] sm:$0xff] %vm1209, %v1166
      %1228 = vst.msk [vmem:[%s118 + $0x90] sm:$0xff] %vm1209, %v1169
      %1229 = vst.msk [vmem:[%s118 + $0x98] sm:$0xff] %vm1209, %v1172
      %1230 = vst.msk [vmem:[%s118 + $0xa0] sm:$0xff] %vm1209, %v1175
      %1231 = vst.msk [vmem:[%s118 + $0xa8] sm:$0xff] %vm1209, %v1178
      %1232 = vst.msk [vmem:[%s118 + $0xb0] sm:$0xff] %vm1209, %v1181
      %1233 = vst.msk [vmem:[%s118 + $0xb8] sm:$0xff] %vm1209, %v1184
      %1234 = vst.msk [vmem:[%s118 + $0xc0] sm:$0xff] %vm1209, %v1187
      %1235 = vst.msk [vmem:[%s118 + $0xc8] sm:$0xff] %vm1209, %v1190
      %1236 = vst.msk [vmem:[%s118 + $0xd0] sm:$0xff] %vm1209, %v1193
      %1237 = vst.msk [vmem:[%s118 + $0xd8] sm:$0xff] %vm1209, %v1196
      %1238 = vst.msk [vmem:[%s118 + $0xe0] sm:$0xff] %vm1209, %v1199
      %1239 = vst.msk [vmem:[%s118 + $0xe8] sm:$0xff] %vm1209, %v1202
      %1240 = vst.msk [vmem:[%s118 + $0xf0] sm:$0xff] %vm1209, %v1205
      %1241 = vst.msk [vmem:[%s118 + $0xf8] sm:$0xff] %vm1209, %v1208
      %s1242 = smul.u32 32, %s12
      %p1243 = scmp.lt.s32.totalorder %s1242, 63
      %s1244 = scalar_select %p1243, %s1242, 63
      %s1245 = smul.addr %s1244, 8
      %s1246 = scalar_lea.vmem %s1, %s1245
      // Predicated region
      $region25: #{factorization_machine.1} parent=23 // pred_check
        %p1247 = pneg %p56
      $region26: #{factorization_machine.1} parent=23 // pred_check_branch
        %1249 = sbr.rel (%p1247) target = $region28
      $region27: #{factorization_machine.1} parent=23 // pred_region
        %s1250 = smul.u32 32, %s12
      $region28: #{factorization_machine.1} parent=23 // pred_fallthru
        _
    $region24: #{factorization_machine.1} parent=5 // pred_fallthru
      _
    %p1251 = scmp.le.s32.totalorder 2, %s7
    // Predicated region
    $region29: #{factorization_machine.1} parent=5 // pred_check
      %p1252 = pneg %p1251
    $region30: #{factorization_machine.1} parent=5 // pred_check_branch
      %1254 = sbr.rel (%p1252) target = $region32
    $region31: #{factorization_machine.1} parent=5 // pred_region
      %s1255 = ssub.s32 %s7, 2
      // Predicated region
      $region33: #{factorization_machine.1} parent=31 // pred_check
        %p1256 = pneg %p62
      $region34: #{factorization_machine.1} parent=31 // pred_check_branch
        %1258 = sbr.rel (%p1256) target = $region36
      $region35: #{factorization_machine.1} parent=31 // pred_region
        %s1259 = smul.u32 32, %s13
        %p1260 = scmp.lt.s32.totalorder %s1259, 63
        %s1261 = scalar_select %p1260, %s1259, 63
        %s1262 = smul.addr %s1261, 8
        %s1263 = scalar_lea.vmem %s1, %s1262
      $region36: #{factorization_machine.1} parent=31 // pred_fallthru
        _
    $region32: #{factorization_machine.1} parent=5 // pred_fallthru
      _
  $region6: #{factorization_machine.1} parent=0 // loop_footer
    %s11 = sadd.s32 1, %s7
  $region7: #{factorization_machine.1} parent=0 // loop_footer_branch
    %6 = sbr.rel target = $region3
  $region8: #{factorization_machine.1} parent=0 // loop_exit
    _

</llo_original>
